<compile_context>
chip_gen: v6e
topology: v6e:2x2x1
jax: 0.10.0
libtpu: 0.0.40
codegen_flags: <defaults>
</compile_context>

<pallas_src>
import jax
import jax.numpy as jnp
import numpy as np
from jax.experimental import pallas as pl
from jax.experimental.pallas import tpu as pltpu

EPS = 1e-5  # nn.BatchNorm1d default eps


# ---------------------------------------------------------------------------
# Pallas kernel: whole (flattened) batch in one shot.
#   x_ref : (R, Din)       flattened input rows
#   w_ref : (Din, Dout)    linear weight, pre-transposed
#   p_ref : (5, Dout)      packed [bias, gamma, beta, running_mean, running_var]
#   o_ref : (R, Dout)
# ---------------------------------------------------------------------------
def dim_reduce_kernel(x_ref, w_ref, p_ref, o_ref):
    x = x_ref[...].astype(jnp.float32)          # (R, Din)
    w = w_ref[...].astype(jnp.float32)          # (Din, Dout)
    p = p_ref[...].astype(jnp.float32)          # (5, Dout)

    bias = p[0:1, :]                            # (1, Dout)
    gamma = p[1:2, :]
    beta = p[2:3, :]
    mean = p[3:4, :]
    var = p[4:5, :]

    # Linear
    z = jnp.dot(x, w, preferred_element_type=jnp.float32) + bias

    # BatchNorm1d (eval mode, running stats) — fold into one scale/shift
    scale = gamma * jax.lax.rsqrt(var + EPS)    # rsqrt -> EUP slot
    z = (z - mean) * scale + beta

    # ReLU  (Dropout is identity in eval mode)
    o_ref[...] = jnp.maximum(z, 0.0).astype(o_ref.dtype)


# ---------------------------------------------------------------------------
# Wrapper: mirrors AfterPoolingDimReduceLayer.forward
# ---------------------------------------------------------------------------
def after_pooling_dim_reduce(x, weight, bias, gamma, beta, running_mean, running_var):
    """x: (N, K, Din) or (R, Din); weight: (Dout, Din); rest: (Dout,)."""
    is_3d = x.ndim == 3
    if is_3d:
        N, K, Din = x.shape
        x2d = x.reshape(N * K, Din)
    else:
        x2d = x
    R, Din = x2d.shape
    Dout = weight.shape[0]

    w_t = weight.T                               # (Din, Dout), done once in the wrapper
    packed = jnp.stack([bias, gamma, beta, running_mean, running_var], axis=0)  # (5, Dout)

    vmem = pl.BlockSpec(memory_space=pltpu.MemorySpace.VMEM)
    out2d = pl.pallas_call(
        dim_reduce_kernel,
        out_shape=jax.ShapeDtypeStruct((R, Dout), x.dtype),
        in_specs=[vmem, vmem, vmem],
        out_specs=vmem,
    )(x2d, w_t, packed)

    if is_3d:
        return out2d.reshape(N, K, Dout)
    return out2d


# ---------------------------------------------------------------------------
# Pure-JAX reference (mirrors PyTorch eval-mode forward) for validation.
# ---------------------------------------------------------------------------
def reference(x, weight, bias, gamma, beta, running_mean, running_var):
    lead = x.shape[:-1]
    x2 = x.reshape(-1, x.shape[-1])
    z = x2 @ weight.T + bias
    z = (z - running_mean) / jnp.sqrt(running_var + EPS) * gamma + beta
    z = jnp.maximum(z, 0.0)
    return z.reshape(lead + (weight.shape[0],))


if __name__ == "__main__":
    key = jax.random.PRNGKey(0)
    kx, kw, kb, kg, kbe, km, kv = jax.random.split(key, 7)

    # Small shapes consistent with the module: (N, K, input_dim) -> (N, K, output_dim)
    N, K = 2, 8
    INPUT_DIM, OUTPUT_DIM = 256, 128

    x = jax.random.normal(kx, (N, K, INPUT_DIM), dtype=jnp.float32)

    # Parameters. Linear init matches _init_params (normal(0, 0.01), bias 0) but we
    # perturb bias / BN params so BatchNorm is non-trivial in the test.
    weight = 0.01 * jax.random.normal(kw, (OUTPUT_DIM, INPUT_DIM), dtype=jnp.float32)
    bias = 0.01 * jax.random.normal(kb, (OUTPUT_DIM,), dtype=jnp.float32)
    gamma = 1.0 + 0.05 * jax.random.normal(kg, (OUTPUT_DIM,), dtype=jnp.float32)
    beta = 0.05 * jax.random.normal(kbe, (OUTPUT_DIM,), dtype=jnp.float32)
    running_mean = 0.05 * jax.random.normal(km, (OUTPUT_DIM,), dtype=jnp.float32)
    running_var = 1.0 + 0.1 * jax.random.uniform(kv, (OUTPUT_DIM,), dtype=jnp.float32)

    # 3-D path (flatten -> layers -> reshape), as in the PyTorch forward
    out3d = jax.block_until_ready(
        after_pooling_dim_reduce(x, weight, bias, gamma, beta, running_mean, running_var)
    )
    ref3d = jax.block_until_ready(
        reference(x, weight, bias, gamma, beta, running_mean, running_var)
    )
    if not np.allclose(np.asarray(out3d), np.asarray(ref3d), atol=1e-5, rtol=1e-5):
        raise AssertionError("Pallas kernel (3-D input) mismatch vs JAX reference")

    # 2-D path
    x2d = x.reshape(N * K, INPUT_DIM)
    out2d = jax.block_until_ready(
        after_pooling_dim_reduce(x2d, weight, bias, gamma, beta, running_mean, running_var)
    )
    ref2d = jax.block_until_ready(
        reference(x2d, weight, bias, gamma, beta, running_mean, running_var)
    )
    if not np.allclose(np.asarray(out2d), np.asarray(ref2d), atol=1e-5, rtol=1e-5):
        raise AssertionError("Pallas kernel (2-D input) mismatch vs JAX reference")

    print("KERNEL_OK")
</pallas_src>

<mosaic_0001>
module attributes {stable_mosaic.version = 11 : i64} {
  func.func @dim_reduce_kernel(%arg0: memref<16x256xf32, #tpu.memory_space<vmem>>, %arg1: memref<256x128xf32, #tpu.memory_space<vmem>>, %arg2: memref<5x128xf32, #tpu.memory_space<vmem>>, %arg3: memref<16x128xf32, #tpu.memory_space<vmem>>) attributes {dimension_semantics = [], scalar_prefetch = 0 : i64, scratch_operands = 0 : i64, tpu.core_type = #tpu.core_type<tc>} {
    %c0 = arith.constant 0 : index
    %c0_0 = arith.constant 0 : index
    %0 = vector.load %arg0[%c0, %c0_0] : memref<16x256xf32, #tpu.memory_space<vmem>>, vector<16x256xf32>
    %c0_1 = arith.constant 0 : index
    %c0_2 = arith.constant 0 : index
    %1 = vector.load %arg1[%c0_1, %c0_2] : memref<256x128xf32, #tpu.memory_space<vmem>>, vector<256x128xf32>
    %c0_3 = arith.constant 0 : index
    %c0_4 = arith.constant 0 : index
    %2 = vector.load %arg2[%c0_3, %c0_4] : memref<5x128xf32, #tpu.memory_space<vmem>>, vector<5x128xf32>
    %3 = vector.extract_strided_slice %2 {offsets = [0, 0], sizes = [1, 128], strides = [1, 1]} : vector<5x128xf32> to vector<1x128xf32>
    %4 = vector.extract_strided_slice %2 {offsets = [1, 0], sizes = [1, 128], strides = [1, 1]} : vector<5x128xf32> to vector<1x128xf32>
    %5 = vector.extract_strided_slice %2 {offsets = [2, 0], sizes = [1, 128], strides = [1, 1]} : vector<5x128xf32> to vector<1x128xf32>
    %6 = vector.extract_strided_slice %2 {offsets = [3, 0], sizes = [1, 128], strides = [1, 1]} : vector<5x128xf32> to vector<1x128xf32>
    %7 = vector.extract_strided_slice %2 {offsets = [4, 0], sizes = [1, 128], strides = [1, 1]} : vector<5x128xf32> to vector<1x128xf32>
    %cst = arith.constant dense<0.000000e+00> : vector<16x128xf32>
    %8 = tpu.matmul %0, %1, %cst {dimension_numbers = #tpu.dot_dimension_numbers<[1], [0], [0], [1], [0, 0, 1, 1], [], []>} : vector<16x256xf32>, vector<256x128xf32>, vector<16x128xf32> -> vector<16x128xf32>
    %9 = vector.broadcast %3 : vector<1x128xf32> to vector<16x128xf32>
    %10 = arith.addf %8, %9 : vector<16x128xf32>
    %cst_5 = arith.constant 9.99999974E-6 : f32
    %11 = vector.broadcast %cst_5 : f32 to vector<1x128xf32>
    %12 = arith.addf %7, %11 : vector<1x128xf32>
    %13 = math.rsqrt %12 : vector<1x128xf32>
    %14 = arith.mulf %4, %13 : vector<1x128xf32>
    %15 = vector.broadcast %6 : vector<1x128xf32> to vector<16x128xf32>
    %16 = arith.subf %10, %15 : vector<16x128xf32>
    %17 = vector.broadcast %14 : vector<1x128xf32> to vector<16x128xf32>
    %18 = arith.mulf %16, %17 : vector<16x128xf32>
    %19 = vector.broadcast %5 : vector<1x128xf32> to vector<16x128xf32>
    %20 = arith.addf %18, %19 : vector<16x128xf32>
    %cst_6 = arith.constant 0.000000e+00 : f32
    %21 = vector.broadcast %cst_6 : f32 to vector<16x128xf32>
    %22 = arith.maximumf %20, %21 : vector<16x128xf32>
    %c0_7 = arith.constant 0 : index
    %c0_8 = arith.constant 0 : index
    %23 = vector.load %arg3[%c0_7, %c0_8] : memref<16x128xf32, #tpu.memory_space<vmem>>, vector<16x128xf32>
    tpu.vector_store %arg3[%c0_7, %c0_8], %22 {strides = array<i32>} : memref<16x128xf32, #tpu.memory_space<vmem>>, vector<16x128xf32>,
    return
  }
}

</mosaic_0001>

<llo_original>
// kernel: tpu_custom_call.1
$region0: #{tpu_custom_call.1}
  #allocation0 [shape = 'u32[]', space=smem, size = 0x4, offset = 0x4, fixed_abs, tag = 'smem constant byte address 0x4 - core index']
  #allocation1 [shape = 'u32[144,128]{1,0:T(1,128)}', space=vmem, size = 0x12000, scoped, tag = 'internal scratch']
  %s0 = inlined_call_operand.hbm [shape: f32[16,256], index: 0, kind: input, shape index: {}]
  %s1 = inlined_call_operand.hbm [shape: f32[256,128], index: 1, kind: input, shape index: {}]
  %s2 = inlined_call_operand.hbm [shape: f32[5,128], index: 2, kind: input, shape index: {}]
  %s3 = inlined_call_operand.hbm [shape: f32[16,128], index: 3, kind: output, shape index: {}]
  %s4 = sld [smem:[#allocation0]]
  $region34: #{tpu_custom_call.1} parent=0
    _
  %s6 = ssub.s32 1, %s4
  %s7 = scalar_select 0, %s6, %s4
  $region1: #{tpu_custom_call.1} parent=0
    #allocation2 [shape = 'u8[16384]{0}', space=vmem, size = 0x4000, scoped, tag = 'input window, operand 0, single buffered']
    #allocation3 [shape = 's32[1]{0}', space=sflag, size = 0x4, scoped, tag = 'scoped memory for tpu_custom_call.1']
    #allocation4 [shape = 's32[1]{0}', space=sflag, size = 0x4, scoped, tag = 'scoped memory for tpu_custom_call.1']
    #allocation5 [shape = 'u8[131072]{0}', space=vmem, size = 0x20000, scoped, tag = 'input window, operand 1, single buffered']
    #allocation6 [shape = 's32[1]{0}', space=sflag, size = 0x4, scoped, tag = 'scoped memory for tpu_custom_call.1']
    #allocation7 [shape = 'u8[4096]{0}', space=vmem, size = 0x1000, scoped, tag = 'input window, operand 2, single buffered']
    #allocation8 [shape = 'u8[8192]{0}', space=vmem, size = 0x2000, scoped, tag = 'output window, operand 0, single buffered']
    %8 = vsyncpa [#allocation3], 0
    %9 = vsyncpa [#allocation6], 0
    %10 = vsyncpa [#allocation4], 0
    // Predicated region
    $region2: #{tpu_custom_call.1} parent=1 // pred_check
      _
    $region3: #{tpu_custom_call.1} parent=1 // pred_check_branch
      %12 = sbr.rel (0) target = $region5
    $region4: #{tpu_custom_call.1} parent=1 // pred_region
      %s14 = ssub.s32 512, 512
      %15 = vsyncadd [#allocation3], %s14
      %s16 = sshll.u32 [#allocation2], 4
      %s17 = int_to_ptr.vmem [resolvable:$true] %s16
      %22 = dma.hbm_to_vmem [thread:$0]  %s0, 512, %s17, [#allocation3], 256, 256, 16
    $region5: #{tpu_custom_call.1} parent=1 // pred_fallthru
      _
    // Predicated region
    $region6: #{tpu_custom_call.1} parent=1 // pred_check
      _
    $region7: #{tpu_custom_call.1} parent=1 // pred_check_branch
      %24 = sbr.rel (0) target = $region9
    $region8: #{tpu_custom_call.1} parent=1 // pred_region
      %s26 = ssub.s32 4096, 4096
      %27 = vsyncadd [#allocation6], %s26
      %s28 = sshll.u32 [#allocation5], 4
      %s29 = int_to_ptr.vmem [resolvable:$true] %s28
      %34 = dma.hbm_to_vmem [thread:$0]  %s1, 4096, %s29, [#allocation6], 128, 128, 8
    $region9: #{tpu_custom_call.1} parent=1 // pred_fallthru
      _
    // Predicated region
    $region10: #{tpu_custom_call.1} parent=1 // pred_check
      _
    $region11: #{tpu_custom_call.1} parent=1 // pred_check_branch
      %36 = sbr.rel (0) target = $region13
    $region12: #{tpu_custom_call.1} parent=1 // pred_region
      %s38 = ssub.s32 128, 128
      %39 = vsyncadd [#allocation6], %s38
      %s41 = sshll.u32 [#allocation7], 4
      %s42 = int_to_ptr.vmem [resolvable:$true] %s41
      %44 = dma.hbm_to_vmem [thread:$0]  %s2, 128, %s42, [#allocation6]
    $region13: #{tpu_custom_call.1} parent=1 // pred_fallthru
      _
    // Predicated region
    $region14: #{tpu_custom_call.1} parent=1 // pred_check
      _
    $region15: #{tpu_custom_call.1} parent=1 // pred_check_branch
      %46 = sbr.rel (0) target = $region17
    $region16: #{tpu_custom_call.1} parent=1 // pred_region
      %47 = dma.done [#allocation3], 512
    $region17: #{tpu_custom_call.1} parent=1 // pred_fallthru
      _
    // Predicated region
    $region18: #{tpu_custom_call.1} parent=1 // pred_check
      _
    $region19: #{tpu_custom_call.1} parent=1 // pred_check_branch
      %49 = sbr.rel (0) target = $region21
    $region20: #{tpu_custom_call.1} parent=1 // pred_region
      %50 = dma.done [#allocation6], 4096
    $region21: #{tpu_custom_call.1} parent=1 // pred_fallthru
      _
    // Predicated region
    $region22: #{tpu_custom_call.1} parent=1 // pred_check
      _
    $region23: #{tpu_custom_call.1} parent=1 // pred_check_branch
      %52 = sbr.rel (0) target = $region25
    $region24: #{tpu_custom_call.1} parent=1 // pred_region
      %53 = dma.done [#allocation6], 128
    $region25: #{tpu_custom_call.1} parent=1 // pred_fallthru
      _
    %v54 = vld [vmem:[#allocation2] sm:$0xff]
    %v55 = vld [vmem:[#allocation2 + $0x8] sm:$0xff]
    %v56 = vld [vmem:[#allocation2 + $0x10] sm:$0xff]
    %v57 = vld [vmem:[#allocation2 + $0x18] sm:$0xff]
    %v58 = vld [vmem:[#allocation5] sm:$0xff]
    %v59 = vld [vmem:[#allocation5 + $0x8] sm:$0xff]
    %v60 = vld [vmem:[#allocation5 + $0x10] sm:$0xff]
    %v61 = vld [vmem:[#allocation5 + $0x18] sm:$0xff]
    %v62 = vld [vmem:[#allocation5 + $0x20] sm:$0xff]
    %v63 = vld [vmem:[#allocation5 + $0x28] sm:$0xff]
    %v64 = vld [vmem:[#allocation5 + $0x30] sm:$0xff]
    %v65 = vld [vmem:[#allocation5 + $0x38] sm:$0xff]
    %v66 = vld [vmem:[#allocation5 + $0x40] sm:$0xff]
    %v67 = vld [vmem:[#allocation5 + $0x48] sm:$0xff]
    %v68 = vld [vmem:[#allocation5 + $0x50] sm:$0xff]
    %v69 = vld [vmem:[#allocation5 + $0x58] sm:$0xff]
    %v70 = vld [vmem:[#allocation5 + $0x60] sm:$0xff]
    %v71 = vld [vmem:[#allocation5 + $0x68] sm:$0xff]
    %v72 = vld [vmem:[#allocation5 + $0x70] sm:$0xff]
    %v73 = vld [vmem:[#allocation5 + $0x78] sm:$0xff]
    %v74 = vld [vmem:[#allocation5 + $0x80] sm:$0xff]
    %v75 = vld [vmem:[#allocation5 + $0x88] sm:$0xff]
    %v76 = vld [vmem:[#allocation5 + $0x90] sm:$0xff]
    %v77 = vld [vmem:[#allocation5 + $0x98] sm:$0xff]
    %v78 = vld [vmem:[#allocation5 + $0xa0] sm:$0xff]
    %v79 = vld [vmem:[#allocation5 + $0xa8] sm:$0xff]
    %v80 = vld [vmem:[#allocation5 + $0xb0] sm:$0xff]
    %v81 = vld [vmem:[#allocation5 + $0xb8] sm:$0xff]
    %v82 = vld [vmem:[#allocation5 + $0xc0] sm:$0xff]
    %v83 = vld [vmem:[#allocation5 + $0xc8] sm:$0xff]
    %v84 = vld [vmem:[#allocation5 + $0xd0] sm:$0xff]
    %v85 = vld [vmem:[#allocation5 + $0xd8] sm:$0xff]
    %v86 = vld [vmem:[#allocation5 + $0xe0] sm:$0xff]
    %v87 = vld [vmem:[#allocation5 + $0xe8] sm:$0xff]
    %v88 = vld [vmem:[#allocation5 + $0xf0] sm:$0xff]
    %v89 = vld [vmem:[#allocation5 + $0xf8] sm:$0xff]
    %v90 = vld [vmem:[#allocation7] sm:$0x1f]
    %v91 = vlaneseq
    %v92 = vshrl.u32 %v91, 7
    %v93 = vsub.s32 0, %v92
    %v94 = vrot.slane %v90, %v93
    %95 = vmatprep.subr.mxu0 0.0
    %96 = vmatpush1.msra.mxu0 %v73
    %97 = vmatprep.subr.mxu0 0.0
    %98 = vmatpush1.msra.mxu0 %v72
    %99 = vmatprep.subr.mxu0 0.0
    %100 = vmatpush1.msra.mxu0 %v71
    %101 = vmatprep.subr.mxu0 0.0
    %102 = vmatpush1.msra.mxu0 %v70
    %103 = vmatprep.subr.mxu0 0.0
    %104 = vmatpush1.msra.mxu0 %v69
    %105 = vmatprep.subr.mxu0 0.0
    %106 = vmatpush1.msra.mxu0 %v68
    %107 = vmatprep.subr.mxu0 0.0
    %108 = vmatpush1.msra.mxu0 %v67
    %109 = vmatprep.subr.mxu0 0.0
    %110 = vmatpush1.msra.mxu0 %v66
    %111 = vmatprep.subr.mxu0 0.0
    %112 = vmatpush1.msra.mxu0 %v65
    %113 = vmatprep.subr.mxu0 0.0
    %114 = vmatpush1.msra.mxu0 %v64
    %115 = vmatprep.subr.mxu0 0.0
    %116 = vmatpush1.msra.mxu0 %v63
    %117 = vmatprep.subr.mxu0 0.0
    %118 = vmatpush1.msra.mxu0 %v62
    %119 = vmatprep.subr.mxu0 0.0
    %120 = vmatpush1.msra.mxu0 %v61
    %121 = vmatprep.subr.mxu0 0.0
    %122 = vmatpush1.msra.mxu0 %v60
    %123 = vmatprep.subr.mxu0 0.0
    %124 = vmatpush1.msra.mxu0 %v59
    %125 = vmatprep.subr.mxu0 0.0
    %126 = vmatpush1.msra.mxu0 %v58
    %127 = vmatprep.subr.mxu0 0.0
    %128 = vmatpush2.msra.mxu0 %v89
    %129 = vmatprep.subr.mxu0 0.0
    %130 = vmatpush2.msra.mxu0 %v88
    %131 = vmatprep.subr.mxu0 0.0
    %132 = vmatpush2.msra.mxu0 %v87
    %133 = vmatprep.subr.mxu0 0.0
    %134 = vmatpush2.msra.mxu0 %v86
    %135 = vmatprep.subr.mxu0 0.0
    %136 = vmatpush2.msra.mxu0 %v85
    %137 = vmatprep.subr.mxu0 0.0
    %138 = vmatpush2.msra.mxu0 %v84
    %139 = vmatprep.subr.mxu0 0.0
    %140 = vmatpush2.msra.mxu0 %v83
    %141 = vmatprep.subr.mxu0 0.0
    %142 = vmatpush2.msra.mxu0 %v82
    %143 = vmatprep.subr.mxu0 0.0
    %144 = vmatpush2.msra.mxu0 %v81
    %145 = vmatprep.subr.mxu0 0.0
    %146 = vmatpush2.msra.mxu0 %v80
    %147 = vmatprep.subr.mxu0 0.0
    %148 = vmatpush2.msra.mxu0 %v79
    %149 = vmatprep.subr.mxu0 0.0
    %150 = vmatpush2.msra.mxu0 %v78
    %151 = vmatprep.subr.mxu0 0.0
    %152 = vmatpush2.msra.mxu0 %v77
    %153 = vmatprep.subr.mxu0 0.0
    %154 = vmatpush2.msra.mxu0 %v76
    %155 = vmatprep.subr.mxu0 0.0
    %156 = vmatpush2.msra.mxu0 %v75
    %157 = vmatprep.subr.mxu0 0.0
    %158 = vmatpush2.msra.mxu0 %v74
    %159 = vmatprep.mubr.f32.mxu0 %v55
    %160 = vmatmul.mubr.f32.gmra.mxu0 %v54
    %v161 = vpop.f32.mrf.mxu0
    %v162 = vadd.f32 %v94, %v161
    %v163 = vpop.f32.mrf.mxu0
    %164 = vmatprep.mubr.f32.mxu0 %v57
    %165 = vmatmul.mubr.f32.gmra.mxu0 %v56
    %v166 = vpop.f32.mrf.mxu0
    %v167 = vadd.f32 %v94, %v166
    %v168 = vpop.f32.mrf.mxu0
    %169 = vdwg.mxu0
    %v170 = vadd.f32 %v90, 1e-05
    %v171 = vrsqrt.pop %v170
    %v173 = vrot.slane %v171, 3
    %v175 = vmul.f32 %v90, %v173
    %v176 = vlaneseq
    %v177 = vshrl.u32 %v176, 7
    %v178 = vsub.s32 3, %v177
    %v179 = vrot.slane %v90, %v178
    %v180 = vsub.f32 %v162, %v179
    %v181 = vsub.f32 %v167, %v179
    %v182 = vlaneseq
    %v183 = vshrl.u32 %v182, 7
    %v184 = vsub.s32 1, %v183
    %v185 = vrot.slane %v175, %v184
    %v186 = vmul.f32 %v180, %v185
    %v187 = vmul.f32 %v181, %v185
    %v188 = vlaneseq
    %v189 = vshrl.u32 %v188, 7
    %v190 = vsub.s32 2, %v189
    %v191 = vrot.slane %v90, %v190
    %v192 = vadd.f32 %v186, %v191
    %v193 = vadd.f32 %v187, %v191
    %v194 = vmax.f32 %v192, 0.0
    %v195 = vmax.f32 %v193, 0.0
    %196 = vst [vmem:[#allocation8] sm:$0xff] %v194
    %197 = vst [vmem:[#allocation8 + $0x8] sm:$0xff] %v195
    // Predicated region
    $region26: #{tpu_custom_call.1} parent=1 // pred_check
      _
    $region27: #{tpu_custom_call.1} parent=1 // pred_check_branch
      %199 = sbr.rel (0) target = $region29
    $region28: #{tpu_custom_call.1} parent=1 // pred_region
      %s201 = ssub.s32 256, 256
      %202 = vsyncadd [#allocation4], %s201
      %s203 = sshll.u32 [#allocation8], 4
      %s204 = int_to_ptr.vmem [resolvable:$true] %s203
      %209 = dma.vmem_to_hbm [thread:$0]  %s204, 256, %s3, [#allocation4], 128, 128, 8
    $region29: #{tpu_custom_call.1} parent=1 // pred_fallthru
      _
    // Predicated region
    $region30: #{tpu_custom_call.1} parent=1 // pred_check
      _
    $region31: #{tpu_custom_call.1} parent=1 // pred_check_branch
      %211 = sbr.rel (0) target = $region33
    $region32: #{tpu_custom_call.1} parent=1 // pred_region
      %212 = dma.done [#allocation4], 256
    $region33: #{tpu_custom_call.1} parent=1 // pred_fallthru
      _
    %213 = vsyncpa [#allocation3], 1
    %214 = vsyncpa [#allocation6], 1
    %215 = vsyncpa [#allocation4], 1

</llo_original>
